<compile_context>
chip_gen: v7x
topology: tpu7x:2x2x1
jax: 0.10.0
libtpu: 0.0.40
codegen_flags: <defaults>
</compile_context>

<pallas_src>
import jax
import jax.numpy as jnp
from jax.experimental import pallas as pl
from jax.experimental.pallas import tpu as pltpu

_LANES = 128                     # vreg lane width; lane-dense last dim
_MAX_TILE_ROWS = 8192            # 8192 x 128 f32 = 4 MiB per block
_VMEM_LIMIT_BYTES = 32 * 1024 * 1024   # 2x(in) + 2x(out) 4 MiB blocks + headroom


def _linear_sigmoid_kernel(wb_ref, x_ref, o_ref):
    # wb_ref: (2,) f32 in SMEM -> [weight, bias] scalars (scalar path, no VMEM tile).
    # x_ref, o_ref: (tile_rows, 128) lane-dense VMEM tiles.
    w = wb_ref[0]
    b = wb_ref[1]
    z = x_ref[...] * w + b                 # == x @ W.T + b for a 1x1 weight
    # sigmoid(z) == 0.5 * tanh(0.5 * z) + 0.5  (exact; single EUP transcendental)
    o_ref[...] = (0.5 * jnp.tanh(0.5 * z) + 0.5).astype(o_ref.dtype)


def linear_sigmoid(x, weight, bias):
    """sigmoid(x @ weight.T + bias) for nn.Linear(1, 1).

    x: (..., 1) float32, weight: (1, 1), bias: (1,). Returns same shape as x.
    The op is elementwise per scalar element, so the wrapper reshapes x into a
    lane-dense (rows, 128) slab and tiles the row axis — layout plumbing only.
    """
    orig_shape = x.shape
    total = x.size

    x_flat = jnp.ravel(x)
    pad = (-total) % _LANES          # static Python int
    if pad:
        x_flat = jnp.pad(x_flat, (0, pad))
    rows = (total + pad) // _LANES
    x2 = x_flat.reshape(rows, _LANES)

    # Block rows: multiple of 8 sublanes, capped at 4 MiB/block.
    tile_rows = min(_MAX_TILE_ROWS, ((rows + 7) // 8) * 8)
    grid = pl.cdiv(rows, tile_rows)  # partial last block masked by Pallas

    wb = jnp.concatenate([jnp.ravel(weight), jnp.ravel(bias)]).astype(jnp.float32)

    out2 = pl.pallas_call(
        _linear_sigmoid_kernel,
        out_shape=jax.ShapeDtypeStruct((rows, _LANES), x.dtype),
        grid=(grid,),
        in_specs=[
            pl.BlockSpec(memory_space=pltpu.MemorySpace.SMEM),     # packed [w, b]
            pl.BlockSpec((tile_rows, _LANES), lambda i: (i, 0)),   # x tile
        ],
        out_specs=pl.BlockSpec((tile_rows, _LANES), lambda i: (i, 0)),
        compiler_params=pltpu.CompilerParams(
            # Independent batch tiles -> shard across v7x's 2 TensorCores.
            dimension_semantics=("parallel",),
            vmem_limit_bytes=_VMEM_LIMIT_BYTES,
        ),
    )(wb, x2)

    out_flat = jnp.ravel(out2)
    if pad:
        out_flat = out_flat[:total]
    return out_flat.reshape(orig_shape)


if __name__ == "__main__":
    key = jax.random.PRNGKey(0)
    kx, kw, kb = jax.random.split(key, 3)

    # nn.Linear(1, 1) parameters: weight (1, 1), bias (1,).
    weight = jax.random.uniform(kw, (1, 1), jnp.float32, minval=-1.0, maxval=1.0)
    bias = jax.random.uniform(kb, (1,), jnp.float32, minval=-1.0, maxval=1.0)

    # Small example input: batch of 8 scalars, shape (8, 1).
    x = jax.random.normal(kx, (8, 1), jnp.float32)

    y = jax.block_until_ready(linear_sigmoid(x, weight, bias))
    y_ref = jax.nn.sigmoid(x @ weight.T + bias)
    assert y.shape == x.shape
    assert jnp.allclose(y, y_ref, atol=1e-5), (y, y_ref)

    # Batch not a multiple of 128 exercises the (tiny) lane-padding path.
    x2 = jax.random.normal(kx, (1000, 1), jnp.float32)
    y2 = jax.block_until_ready(linear_sigmoid(x2, weight, bias))
    y2_ref = jax.nn.sigmoid(x2 @ weight.T + bias)
    assert jnp.allclose(y2, y2_ref, atol=1e-5)

    # Batch that is a multiple of 128 takes the zero-copy (no pad / no slice) path.
    x3 = jax.random.normal(kx, (512, 1), jnp.float32)
    y3 = jax.block_until_ready(linear_sigmoid(x3, weight, bias))
    y3_ref = jax.nn.sigmoid(x3 @ weight.T + bias)
    assert jnp.allclose(y3, y3_ref, atol=1e-5)

    print("KERNEL_OK")
</pallas_src>

<mosaic_0001>
module attributes {stable_mosaic.version = 11 : i64} {
  func.func @_linear_sigmoid_kernel(%arg0: i32, %arg1: memref<2xf32, #tpu.memory_space<smem>>, %arg2: memref<8x128xf32, #tpu.memory_space<vmem>>, %arg3: memref<8x128xf32, #tpu.memory_space<vmem>>) attributes {dimension_semantics = [#tpu.dimension_semantics<parallel>], iteration_bounds = array<i64: 1>, scalar_prefetch = 0 : i64, scratch_operands = 0 : i64, tpu.core_type = #tpu.core_type<tc>, window_params = [{transform_indices = @transform_0, window_bounds = array<i64: 2>}, {transform_indices = @transform_1, window_bounds = array<i64: 8, 128>}, {transform_indices = @transform_2, window_bounds = array<i64: 8, 128>}]} {
    %c0 = arith.constant 0 : index
    %0 = memref.load %arg1[%c0] : memref<2xf32, #tpu.memory_space<smem>>
    %c1 = arith.constant 1 : index
    %1 = memref.load %arg1[%c1] : memref<2xf32, #tpu.memory_space<smem>>
    %c0_0 = arith.constant 0 : index
    %c0_1 = arith.constant 0 : index
    %2 = vector.load %arg2[%c0_0, %c0_1] : memref<8x128xf32, #tpu.memory_space<vmem>>, vector<8x128xf32>
    %3 = vector.broadcast %0 : f32 to vector<8x128xf32>
    %4 = arith.mulf %2, %3 : vector<8x128xf32>
    %5 = vector.broadcast %1 : f32 to vector<8x128xf32>
    %6 = arith.addf %4, %5 : vector<8x128xf32>
    %cst = arith.constant 5.000000e-01 : f32
    %7 = vector.broadcast %cst : f32 to vector<8x128xf32>
    %8 = arith.mulf %7, %6 : vector<8x128xf32>
    %9 = math.tanh %8 : vector<8x128xf32>
    %cst_2 = arith.constant 5.000000e-01 : f32
    %10 = vector.broadcast %cst_2 : f32 to vector<8x128xf32>
    %11 = arith.mulf %10, %9 : vector<8x128xf32>
    %cst_3 = arith.constant 5.000000e-01 : f32
    %12 = vector.broadcast %cst_3 : f32 to vector<8x128xf32>
    %13 = arith.addf %11, %12 : vector<8x128xf32>
    %c0_4 = arith.constant 0 : index
    %c0_5 = arith.constant 0 : index
    %14 = vector.load %arg3[%c0_4, %c0_5] : memref<8x128xf32, #tpu.memory_space<vmem>>, vector<8x128xf32>
    tpu.vector_store %arg3[%c0_4, %c0_5], %13 {strides = array<i32>} : memref<8x128xf32, #tpu.memory_space<vmem>>, vector<8x128xf32>,
    return
  }
  func.func @transform_0(%arg0: i32) -> i32 {
    %c0_i32 = arith.constant 0 : i32
    %c0_i32_0 = arith.constant 0 : i32
    return %c0_i32 : i32
  }
  func.func @transform_1(%arg0: i32) -> (i32, i32) {
    %c0_i32 = arith.constant 0 : i32
    %c0_i32_0 = arith.constant 0 : i32
    return %arg0, %c0_i32 : i32, i32
  }
  func.func @transform_2(%arg0: i32) -> (i32, i32) {
    %c0_i32 = arith.constant 0 : i32
    %c0_i32_0 = arith.constant 0 : i32
    return %arg0, %c0_i32 : i32, i32
  }
}

</mosaic_0001>

<llo_original>
// kernel: tpu_custom_call.1
$region0: #{tpu_custom_call.1}
  #allocation0 [shape = 'u32[]', space=smem, size = 0x4, offset = 0x4, fixed_abs, tag = 'smem constant byte address 0x4 - core index']
  #allocation1 [shape = 'u32[144,128]{1,0:T(1,128)}', space=vmem, size = 0x12000, scoped, tag = 'internal scratch']
  %s0 = inlined_call_operand.hbm [shape: f32[2], index: 0, kind: input, shape index: {}]
  %s1 = inlined_call_operand.vmem [shape: f32[1,128], index: 1, kind: input, shape index: {}]
  %s2 = inlined_call_operand.hbm [shape: f32[1,128], index: 2, kind: output, shape index: {}]
  %s3 = sld [smem:[#allocation0]]
  $region22: #{tpu_custom_call.1} parent=0
    _
  %s5 = ssub.s32 1, %s3
  %s6 = scalar_select 0, %s5, %s3
  $region1: #{tpu_custom_call.1} parent=0
    #allocation2 [shape = 'u8[512]{0}', space=smem, size = 0x200, scoped, tag = 'input window, operand 0, single buffered']
    #allocation3 [shape = 's32[1]{0}', space=sflag, size = 0x4, scoped, tag = 'scoped memory for tpu_custom_call.1']
    #allocation4 [shape = 's32[1]{0}', space=sflag, size = 0x4, scoped, tag = 'scoped memory for tpu_custom_call.1']
    #allocation5 [shape = 'u8[4096]{0}', space=vmem, size = 0x1000, scoped, tag = 'output window, operand 0, single buffered']
    %7 = vsyncpa [#allocation4], 0
    %8 = vsyncpa [#allocation3], 0
    // Predicated region
    $region2: #{tpu_custom_call.1} parent=1 // pred_check
      _
    $region3: #{tpu_custom_call.1} parent=1 // pred_check_branch
      %10 = sbr.rel (0) target = $region5
    $region4: #{tpu_custom_call.1} parent=1 // pred_region
      %s12 = ssub.s32 16, 16
      %13 = vsyncadd [#allocation4], %s12
      %16 = dma.hbm_to_smem %s0, 16, [#allocation2], [#allocation4]
    $region5: #{tpu_custom_call.1} parent=1 // pred_fallthru
      _
    // Predicated region
    $region6: #{tpu_custom_call.1} parent=1 // pred_check
      _
    $region7: #{tpu_custom_call.1} parent=1 // pred_check_branch
      %18 = sbr.rel (0) target = $region9
    $region8: #{tpu_custom_call.1} parent=1 // pred_region
      _
    $region9: #{tpu_custom_call.1} parent=1 // pred_fallthru
      _
    // Predicated region
    $region10: #{tpu_custom_call.1} parent=1 // pred_check
      _
    $region11: #{tpu_custom_call.1} parent=1 // pred_check_branch
      %20 = sbr.rel (0) target = $region13
    $region12: #{tpu_custom_call.1} parent=1 // pred_region
      %21 = dma.done [#allocation4], 16
    $region13: #{tpu_custom_call.1} parent=1 // pred_fallthru
      _
    %22 = sfence
    %s23 = sld [smem:[#allocation2]]
    %s24 = sld [smem:[#allocation2 + $0x1]]
    %v25 = vld [vmem:[%s1] sm:$0xff]
    %v26 = vstv %s23
    %v27 = vmul.f32 %v25, %v26
    %v28 = vstv %s24
    %v29 = vadd.f32 %v27, %v28
    %v30 = vmul.f32 %v29, 0.5
    %v31 = vtanh.pop %v30
    %v32 = vmul.f32 %v31, 0.5
    %v33 = vadd.f32 %v32, 0.5
    %34 = vst [vmem:[#allocation5] sm:$0xff] %v33
    // Predicated region
    $region14: #{tpu_custom_call.1} parent=1 // pred_check
      _
    $region15: #{tpu_custom_call.1} parent=1 // pred_check_branch
      %36 = sbr.rel (0) target = $region17
    $region16: #{tpu_custom_call.1} parent=1 // pred_region
      %s38 = ssub.s32 128, 16
      %39 = vsyncadd [#allocation3], %s38
      %s40 = sshll.u32 [#allocation5], 4
      %s41 = int_to_ptr.vmem [resolvable:$true] %s40
      %46 = dma.vmem_to_hbm [thread:$0]  %s41, 16, %s2, [#allocation3], 16, 16, 1
    $region17: #{tpu_custom_call.1} parent=1 // pred_fallthru
      _
    // Predicated region
    $region18: #{tpu_custom_call.1} parent=1 // pred_check
      _
    $region19: #{tpu_custom_call.1} parent=1 // pred_check_branch
      %48 = sbr.rel (0) target = $region21
    $region20: #{tpu_custom_call.1} parent=1 // pred_region
      %49 = dma.done [#allocation3], 128
    $region21: #{tpu_custom_call.1} parent=1 // pred_fallthru
      _
    %50 = vsyncpa [#allocation3], 1
    %51 = vsyncpa [#allocation4], 1

</llo_original>
